<compile_context>
chip_gen: v6e
topology: v6e:2x2x1
jax: 0.10.0
libtpu: 0.0.40
codegen_flags: <defaults>
</compile_context>

<pallas_src>
import functools

import jax
import jax.numpy as jnp
import numpy as np
from jax import lax
from jax.experimental import pallas as pl
from jax.experimental.pallas import tpu as pltpu

_PI = 3.141592653589793
_EPS = 1e-12
_LANES = 128
_SUBLANES = 8


# ----------------------------------------------------------------------------
# Generation-aware VMEM budget
# ----------------------------------------------------------------------------
def _vmem_capacity_bytes():
    try:
        return int(pltpu.get_tpu_info().vmem_capacity_bytes)
    except Exception:
        return 64 * 1024 * 1024        # conservative fallback (v7x-sized)


_VMEM_CAPACITY = _vmem_capacity_bytes()
_VMEM_LIMIT = int(min(_VMEM_CAPACITY // 2, 64 * 1024 * 1024))


# ----------------------------------------------------------------------------
# In-kernel helpers
# ----------------------------------------------------------------------------
def _l2_normalize(x):
    # mirrors F.normalize(x, p=2, dim=-1): x / max(||x||_2, eps), via rsqrt
    # (EUP) with the eps clamp folded in.
    ssq = jnp.sum(x * x, axis=-1, keepdims=True)
    return x * lax.rsqrt(jnp.maximum(ssq, _EPS * _EPS))


def _row_sum_lanes(x):
    """Row sums of a (TB, D) f32 tile, returned lane-dense as (1, TB).

    Uses the otherwise-idle MXU (ones @ x^T) so the per-row score lands in
    lane orientation and the score store is one unmasked full-lane vst instead
    of TB/8 masked (TB, 1) stores.  The operand is split into a bf16-exact hi
    part plus an f32 residual so the result is f32-accurate regardless of the
    MXU operand precision.
    """
    ones = jnp.ones((1, x.shape[-1]), jnp.float32)
    hi = x.astype(jnp.bfloat16).astype(jnp.float32)
    lo = x - hi
    dn = (((1,), (1,)), ((), ()))            # contract both minor dims: ones @ x^T
    return (lax.dot_general(ones, hi, dn, preferred_element_type=jnp.float32) +
            lax.dot_general(ones, lo, dn, preferred_element_type=jnp.float32))


def _expand_pairs(x, d):
    """(TB, d//2) -> (TB, d) with out[:, 2i] = out[:, 2i+1] = x[:, i].

    Pairwise lane duplication as an exact 0/1 expansion matmul on the idle MXU
    (bf16-exact hi + residual lo).  Replaces the previous wrapper-side
    jnp.repeat, which cost an extra XLA pass over HBM plus an extra (B, D)
    input stream into a memory-bound kernel.
    """
    h = x.shape[-1]
    row = lax.broadcasted_iota(jnp.int32, (h, d), 0)
    col = lax.broadcasted_iota(jnp.int32, (h, d), 1)
    expand = ((col == 2 * row) | (col == 2 * row + 1)).astype(jnp.float32)
    dn = (((1,), (0,)), ((), ()))
    hi = x.astype(jnp.bfloat16).astype(jnp.float32)
    lo = x - hi
    return (lax.dot_general(hi, expand, dn, preferred_element_type=jnp.float32) +
            lax.dot_general(lo, expand, dn, preferred_element_type=jnp.float32))


def _roll_lanes(x, shift):
    """out[..., j] = x[..., (j - shift) % d] (jnp.roll semantics), static shift."""
    d = x.shape[-1]
    shift = shift % d
    if shift == 0:
        return x
    if d % _LANES == 0:
        return pltpu.roll(x, shift=shift, axis=x.ndim - 1)   # single XLU op
    # TODO(synk): non-128-multiple lane dim falls back to two static lane
    # slices; pick D a multiple of 256 in production so this (and the re/im
    # half splits) stays lane-aligned and unmasked.
    return jnp.concatenate([x[..., d - shift:], x[..., :d - shift]], axis=-1)


# ----------------------------------------------------------------------------
# Pallas kernels (one per KGE scoring function, 'positive' mode)
# score_ref block is (1, TB) lane-dense; ke_ref block is (TB, D).
# ----------------------------------------------------------------------------
def _transe_kernel(h_ref, r_ref, t_ref, score_ref, ke_ref, *, gamma):
    h = h_ref[...].astype(jnp.float32)
    r = r_ref[...].astype(jnp.float32)
    t = t_ref[...].astype(jnp.float32)
    score_ref[...] = gamma - _row_sum_lanes(jnp.abs(h + r - t))
    ke_ref[...] = (t - r).astype(ke_ref.dtype)


def _distmult_kernel(h_ref, r_ref, t_ref, score_ref):
    h = h_ref[...].astype(jnp.float32)
    r = r_ref[...].astype(jnp.float32)
    t = t_ref[...].astype(jnp.float32)
    score_ref[...] = _row_sum_lanes(h * r * t)


def _complex_kernel(h_ref, r_ref, t_ref, score_ref, ke_ref):
    h = h_ref[...].astype(jnp.float32)
    r = r_ref[...].astype(jnp.float32)
    t = t_ref[...].astype(jnp.float32)
    half = h.shape[-1] // 2
    re_h, im_h = h[:, :half], h[:, half:]
    re_r, im_r = r[:, :half], r[:, half:]
    re_t, im_t = t[:, :half], t[:, half:]
    re_s = re_h * re_r - im_h * im_r
    im_s = re_h * im_r + im_h * re_r
    score_ref[...] = _row_sum_lanes(re_s * re_t + im_s * im_t)
    # TODO(synk): choose D with D/2 a multiple of 128 so these half-width ke
    # stores become unmasked full-lane stores (and the slices pure offsets).
    ke_ref[:, :half] = (re_r * re_t + im_r * im_t).astype(ke_ref.dtype)
    ke_ref[:, half:] = (re_r * im_t - im_r * re_t).astype(ke_ref.dtype)


def _rotate_kernel(h_ref, r_ref, t_ref, score_ref, ke_ref, *, gamma, phase_scale):
    h = h_ref[...].astype(jnp.float32)
    r = r_ref[...].astype(jnp.float32)
    t = t_ref[...].astype(jnp.float32)
    half = h.shape[-1] // 2
    re_h, im_h = h[:, :half], h[:, half:]
    re_t, im_t = t[:, :half], t[:, half:]
    phase = r * phase_scale
    re_r, im_r = jnp.cos(phase), jnp.sin(phase)
    re_s = re_h * re_r - im_h * im_r - re_t
    im_s = re_h * im_r + im_h * re_r - im_t
    score_ref[...] = gamma - _row_sum_lanes(jnp.sqrt(re_s * re_s + im_s * im_s))
    ke_ref[:, :half] = (re_r * re_t + im_r * im_t).astype(ke_ref.dtype)
    ke_ref[:, half:] = (re_r * im_t - im_r * re_t).astype(ke_ref.dtype)


def _rotatev2_kernel(h_ref, r_ref, t_ref, score_ref, *, gamma, phase_scale):
    h = h_ref[...].astype(jnp.float32)
    r = r_ref[...].astype(jnp.float32)
    t = t_ref[...].astype(jnp.float32)
    half = h.shape[-1] // 2
    re_h, im_h = h[:, :half], h[:, half:]
    re_t, im_t = t[:, :half], t[:, half:]
    phase = r * phase_scale
    re_r, im_r = jnp.cos(phase), jnp.sin(phase)
    q = re_r.shape[-1] // 2
    re_rh, re_rt = re_r[:, :q], re_r[:, q:]
    im_rh, im_rt = im_r[:, :q], im_r[:, q:]
    re_sh = re_h * re_rh - im_h * im_rh
    im_sh = re_h * im_rh + im_h * re_rh
    re_st = re_t * re_rt - im_t * im_rt
    im_st = re_t * im_rt + im_t * re_rt
    re_s = re_sh - re_st
    im_s = im_sh - im_st
    score_ref[...] = gamma - _row_sum_lanes(jnp.sqrt(re_s * re_s + im_s * im_s))


def _pairre_kernel(h_ref, r_ref, t_ref, score_ref, ke_ref, *, gamma):
    h = _l2_normalize(h_ref[...].astype(jnp.float32))
    t = _l2_normalize(t_ref[...].astype(jnp.float32))
    r = r_ref[...].astype(jnp.float32)
    d = h.shape[-1]
    re_head, re_tail = r[:, :d], r[:, d:]
    s = h * re_head - t * re_tail
    score_ref[...] = gamma - _row_sum_lanes(jnp.abs(s))
    # exact reciprocal (approx=False) to match the reference division
    ke_ref[...] = (t * re_tail * pl.reciprocal(re_head, approx=False)
                   ).astype(ke_ref.dtype)


def _compounde_kernel(h_ref, r_ref, t_ref, score_ref, ke_ref,
                      *, gamma, phase_scale):
    # head / tail / relation / ke stay in the reference's interleaved
    # (even, odd) lane layout.  Pairwise rotation:
    #   out[2i]   = cos_i*t[2i] - sin_i*t[2i+1]
    #   out[2i+1] = sin_i*t[2i] + cos_i*t[2i+1]
    h = _l2_normalize(h_ref[...].astype(jnp.float32))
    t = _l2_normalize(t_ref[...].astype(jnp.float32))
    r = r_ref[...].astype(jnp.float32)
    d = h.shape[-1]
    half = d // 2
    scale = r[:, :d]
    translate = r[:, d:2 * d]
    theta = r[:, 2 * d:2 * d + half]                 # first half of third chunk
    phase = _expand_pairs(theta, d) * phase_scale    # theta[i] -> lanes 2i, 2i+1
    c = jnp.cos(phase)
    s = jnp.sin(phase)
    lane = lax.broadcasted_iota(jnp.int32, t.shape, t.ndim - 1)
    is_even = (lane & 1) == 0
    t_next = _roll_lanes(t, -1)                      # t[j+1]
    t_prev = _roll_lanes(t, 1)                       # t[j-1]
    signed_swap = jnp.where(is_even, -t_next, t_prev)
    tail_r = (c * t + s * signed_swap + translate) * scale
    score_ref[...] = gamma - _row_sum_lanes(jnp.abs(h - tail_r))
    ke_ref[...] = tail_r.astype(ke_ref.dtype)


# ----------------------------------------------------------------------------
# Tile sizing + pallas_call helper (batch-tiled grid, double-buffered blocks)
# ----------------------------------------------------------------------------
def _derive_tile(batch, row_elems, max_tile_rows):
    """Rows per block: largest 8/128-multiple tile fitting the double-buffered
    VMEM budget, while keeping >=2 blocks (both v7x TensorCores) and ~>=4
    pipeline steps when the batch allows."""
    bytes_per_row = 2 * 4 * row_elems            # 2x: automatic double-buffering
    budget = max(_VMEM_LIMIT - 4 * 1024 * 1024, 2 * 1024 * 1024)
    tb = max(_SUBLANES, budget // bytes_per_row)
    tb = min(tb, 4096)
    if max_tile_rows is not None:
        tb = min(tb, max(_SUBLANES, int(max_tile_rows)))
    if batch >= 4 * _SUBLANES:
        target_blocks = 4 if batch >= 4 * _LANES else 2
        tb = min(tb, -(-batch // target_blocks))
    if tb >= batch:
        tb = batch                               # single block covers the batch
    elif tb >= _LANES:
        tb = (tb // _LANES) * _LANES             # lane-dense score rows
    else:
        tb = max(_SUBLANES, (tb // _SUBLANES) * _SUBLANES)
    return tb


def _run(kernel, inputs, *, ke_dim=None, ke_dtype=jnp.float32,
         transcendentals_per_row=0, max_tile_rows=None):
    batch = inputs[0].shape[0]
    row_elems = sum(int(np.prod(x.shape[1:])) for x in inputs) + 1
    if ke_dim is not None:
        row_elems += ke_dim

    tb = _derive_tile(batch, row_elems, max_tile_rows)
    grid_n = pl.cdiv(batch, tb)

    def _in_spec(shape):
        nd = len(shape)
        return pl.BlockSpec((tb,) + tuple(shape[1:]),
                            lambda i, _nd=nd: (i,) + (0,) * (_nd - 1))

    in_specs = [_in_spec(x.shape) for x in inputs]

    # Score: lane-dense (1, tb) rows into a (grid_n, tb) slab (reshaped/sliced
    # back to (B,) in the wrapper).
    out_shapes = [jax.ShapeDtypeStruct((grid_n, tb), jnp.float32)]
    out_specs = [pl.BlockSpec((1, tb), lambda i: (i, 0))]
    if ke_dim is not None:
        out_shapes.append(jax.ShapeDtypeStruct((batch, ke_dim), ke_dtype))
        out_specs.append(pl.BlockSpec((tb, ke_dim), lambda i: (i, 0)))

    bytes_accessed = 4 * row_elems * batch
    cost = pl.CostEstimate(
        flops=int(20 * row_elems * batch),
        transcendentals=int(transcendentals_per_row * batch),
        bytes_accessed=int(bytes_accessed))

    outs = pl.pallas_call(
        kernel,
        grid=(grid_n,),
        in_specs=in_specs,
        out_specs=out_specs,
        out_shape=out_shapes,
        compiler_params=pltpu.CompilerParams(
            dimension_semantics=("parallel",),
            vmem_limit_bytes=_VMEM_LIMIT),
        cost_estimate=cost,
    )(*inputs)

    score = outs[0].reshape(-1)[:batch]
    if ke_dim is None:
        return score
    return score, outs[1]


# ----------------------------------------------------------------------------
# Module wrapper (mirrors KGEModel.forward)
# ----------------------------------------------------------------------------
class KGEModelPallas:
    def __init__(self, model_name, gamma, hidden_dim, max_tile_rows=None):
        self.model_name = model_name
        self.epsilon = 2.0
        self.gamma = float(gamma)
        self.embedding_range = (self.gamma + self.epsilon) / hidden_dim
        self.phase_scale = _PI / self.embedding_range
        self.max_tile_rows = max_tile_rows
        self.model_func = {
            'TransE': self.TransE, 'DistMult': self.DistMult,
            'ComplEx': self.ComplEx, 'RotatE': self.RotatE,
            'PairRE': self.PairRE, 'RotatEv2': self.RotatEv2,
            'CompoundE': self.CompoundE,
        }

    def __call__(self, sample, mode='positive'):
        return self.forward(sample, mode)

    def forward(self, sample, mode='positive'):
        if mode == 'positive':
            head, relation, tail = sample
        elif mode == 'negative':
            # TODO(synk): negative-sampling mode (tail reshaped to
            # (neg, n_tail, D) and broadcast against head/relation) not ported.
            raise NotImplementedError("negative mode not implemented in Pallas port")
        else:
            raise ValueError('mode %s not supported' % mode)
        if self.model_name not in self.model_func:
            raise ValueError('model %s not supported' % self.model_name)
        return self.model_func[self.model_name](head, relation, tail, mode)

    # -- per-model wrappers (reshape glue only; math lives in the kernels) ----
    def TransE(self, head, relation, tail, mode):
        B, _, D = head.shape
        h, r, t = head.reshape(B, D), relation.reshape(B, D), tail.reshape(B, D)
        score, ke = _run(
            functools.partial(_transe_kernel, gamma=self.gamma),
            [h, r, t], ke_dim=D, ke_dtype=head.dtype,
            max_tile_rows=self.max_tile_rows)
        return score.reshape(B, 1), ke.reshape(B, 1, D)

    def DistMult(self, head, relation, tail, mode):
        B, _, D = head.shape
        h, r, t = head.reshape(B, D), relation.reshape(B, D), tail.reshape(B, D)
        score = _run(_distmult_kernel, [h, r, t],
                     max_tile_rows=self.max_tile_rows)
        return score.reshape(B, 1)

    def ComplEx(self, head, relation, tail, mode):
        B, _, D = head.shape
        h, r, t = head.reshape(B, D), relation.reshape(B, D), tail.reshape(B, D)
        score, ke = _run(
            _complex_kernel, [h, r, t], ke_dim=D, ke_dtype=head.dtype,
            max_tile_rows=self.max_tile_rows)
        return score.reshape(B, 1), ke.reshape(B, 1, D)

    def RotatE(self, head, relation, tail, mode):
        B, _, D = head.shape
        h, t = head.reshape(B, D), tail.reshape(B, D)
        r = relation.reshape(B, relation.shape[-1])
        score, ke = _run(
            functools.partial(_rotate_kernel, gamma=self.gamma,
                              phase_scale=self.phase_scale),
            [h, r, t], ke_dim=D, ke_dtype=head.dtype,
            transcendentals_per_row=D,
            max_tile_rows=self.max_tile_rows)
        return score.reshape(B, 1), ke.reshape(B, 1, D)

    def RotatEv2(self, head, relation, tail, mode):
        B, _, D = head.shape
        h, r, t = head.reshape(B, D), relation.reshape(B, D), tail.reshape(B, D)
        score = _run(
            functools.partial(_rotatev2_kernel, gamma=self.gamma,
                              phase_scale=self.phase_scale),
            [h, r, t],
            transcendentals_per_row=2 * D,
            max_tile_rows=self.max_tile_rows)
        return score.reshape(B, 1)

    def PairRE(self, head, relation, tail, mode):
        B, _, D = head.shape
        h, t = head.reshape(B, D), tail.reshape(B, D)
        r = relation.reshape(B, 2 * D)
        score, ke = _run(
            functools.partial(_pairre_kernel, gamma=self.gamma),
            [h, r, t], ke_dim=D, ke_dtype=head.dtype,
            transcendentals_per_row=D + 4,
            max_tile_rows=self.max_tile_rows)
        return score.reshape(B, 1), ke.reshape(B, 1, D)

    def CompoundE(self, head, relation, tail, mode):
        # 2-D layout: head/tail (B, D), relation (B, 3*D); everything flows
        # through the kernel untouched (interleaved lane layout, no repeat).
        B, D = head.shape
        score, ke = _run(
            functools.partial(_compounde_kernel, gamma=self.gamma,
                              phase_scale=self.phase_scale),
            [head, relation, tail], ke_dim=D, ke_dtype=head.dtype,
            transcendentals_per_row=2 * D + 2,
            max_tile_rows=self.max_tile_rows)
        return score, ke


# ----------------------------------------------------------------------------
# Pure-jnp references (mirror the PyTorch code) for verification
# ----------------------------------------------------------------------------
def _ref_normalize(x, eps=1e-12):
    n = jnp.sqrt(jnp.sum(x * x, axis=-1, keepdims=True))
    return x / jnp.maximum(n, eps)


def _chunk2(x):
    return jnp.split(x, 2, axis=-1)


def _reference(name, head, relation, tail, gamma, emb_range):
    if name == 'TransE':
        s = head + relation - tail
        return gamma - jnp.sum(jnp.abs(s), axis=-1), tail - relation
    if name == 'DistMult':
        return jnp.sum(head * relation * tail, axis=2)
    if name == 'ComplEx':
        re_h, im_h = _chunk2(head)
        re_r, im_r = _chunk2(relation)
        re_t, im_t = _chunk2(tail)
        re_s = re_h * re_r - im_h * im_r
        im_s = re_h * im_r + im_h * re_r
        score = jnp.sum(re_s * re_t + im_s * im_t, axis=-1)
        ke = jnp.concatenate([re_r * re_t + im_r * im_t,
                              re_r * im_t - im_r * re_t], axis=-1)
        return score, ke
    if name == 'RotatE':
        re_h, im_h = _chunk2(head)
        re_t, im_t = _chunk2(tail)
        phase = relation / (emb_range / _PI)
        re_r, im_r = jnp.cos(phase), jnp.sin(phase)
        re_s = re_h * re_r - im_h * im_r - re_t
        im_s = re_h * im_r + im_h * re_r - im_t
        score = gamma - jnp.sum(jnp.sqrt(re_s ** 2 + im_s ** 2), axis=-1)
        ke = jnp.concatenate([re_r * re_t + im_r * im_t,
                              re_r * im_t - im_r * re_t], axis=-1)
        return score, ke
    if name == 'RotatEv2':
        re_h, im_h = _chunk2(head)
        re_t, im_t = _chunk2(tail)
        phase = relation / (emb_range / _PI)
        re_r, im_r = jnp.cos(phase), jnp.sin(phase)
        re_rh, re_rt = _chunk2(re_r)
        im_rh, im_rt = _chunk2(im_r)
        re_sh = re_h * re_rh - im_h * im_rh
        im_sh = re_h * im_rh + im_h * re_rh
        re_st = re_t * re_rt - im_t * im_rt
        im_st = re_t * im_rt + im_t * re_rt
        return gamma - jnp.sum(jnp.sqrt((re_sh - re_st) ** 2 +
                                        (im_sh - im_st) ** 2), axis=-1)
    if name == 'PairRE':
        re_head, re_tail = _chunk2(relation)
        h = _ref_normalize(head)
        t = _ref_normalize(tail)
        s = h * re_head - t * re_tail
        score = gamma - jnp.sum(jnp.abs(s), axis=-1)
        return score, t * re_tail / re_head
    if name == 'CompoundE':
        B, D = head.shape
        scale, translate, theta = jnp.split(relation, 3, axis=-1)
        theta = jnp.split(theta, 2, axis=-1)[0]
        h = _ref_normalize(head)
        t = _ref_normalize(tail)
        theta = theta / (emb_range / _PI)
        re_rot = jnp.cos(theta)[..., None]
        im_rot = jnp.sin(theta)[..., None]
        t3 = t.reshape(B, -1, 2)
        tail_r = jnp.concatenate([re_rot * t3[:, :, 0:1],
                                  im_rot * t3[:, :, 0:1]], axis=-1)
        tail_r = tail_r + jnp.concatenate([-im_rot * t3[:, :, 1:],
                                           re_rot * t3[:, :, 1:]], axis=-1)
        tail_r = tail_r.reshape(B, -1)
        tail_r = (tail_r + translate) * scale
        score = gamma - jnp.sum(jnp.abs(h - tail_r), axis=-1)
        return score, tail_r
    raise ValueError(name)


# ----------------------------------------------------------------------------
if __name__ == "__main__":
    gamma = 12.0
    D = 64
    hidden_dim = D
    emb_range = (gamma + 2.0) / hidden_dim
    rel_dims = {'TransE': D, 'DistMult': D, 'ComplEx': D, 'RotatE': D // 2,
                'RotatEv2': D, 'PairRE': 2 * D, 'CompoundE': 3 * D}

    key = jax.random.PRNGKey(0)

    # pass 1: small batch, single block.
    # pass 2: multi-block grid (TB=8, 3 blocks).
    # pass 3: ragged last block (B % TB != 0).
    for B, max_tile_rows in ((8, None), (24, 8), (20, 8)):
        for name, rdim in rel_dims.items():
            k1, k2, k3, key = jax.random.split(key, 4)
            if name == 'CompoundE':
                head = jax.random.normal(k1, (B, D), jnp.float32)
                tail = jax.random.normal(k3, (B, D), jnp.float32)
                relation = jax.random.normal(k2, (B, rdim), jnp.float32)
            else:
                head = jax.random.normal(k1, (B, 1, D), jnp.float32)
                tail = jax.random.normal(k3, (B, 1, D), jnp.float32)
                if name == 'PairRE':   # keep re_head away from 0 (ke divides by it)
                    relation = jax.random.uniform(k2, (B, 1, rdim), jnp.float32,
                                                  0.5, 1.5)
                else:
                    relation = jax.random.normal(k2, (B, 1, rdim), jnp.float32)

            model = KGEModelPallas(name, gamma, hidden_dim,
                                   max_tile_rows=max_tile_rows)
            out = model((head, relation, tail), mode='positive')
            out = jax.block_until_ready(out)

            ref = _reference(name, head, relation, tail, gamma, emb_range)
            outs = out if isinstance(out, tuple) else (out,)
            refs = ref if isinstance(ref, tuple) else (ref,)
            for o, r in zip(outs, refs):
                np.testing.assert_allclose(np.asarray(o), np.asarray(r),
                                           rtol=1e-2, atol=1e-2)

    print("KERNEL_OK")
</pallas_src>

<mosaic_0001>
module attributes {stable_mosaic.version = 11 : i64} {
  func.func @_transe_kernel(%arg0: i32, %arg1: memref<8x64xf32, #tpu.memory_space<vmem>>, %arg2: memref<8x64xf32, #tpu.memory_space<vmem>>, %arg3: memref<8x64xf32, #tpu.memory_space<vmem>>, %arg4: memref<1x8xf32, #tpu.memory_space<vmem>>, %arg5: memref<8x64xf32, #tpu.memory_space<vmem>>) attributes {dimension_semantics = [#tpu.dimension_semantics<parallel>], iteration_bounds = array<i64: 1>, scalar_prefetch = 0 : i64, scratch_operands = 0 : i64, tpu.core_type = #tpu.core_type<tc>, window_params = [{transform_indices = @transform_0, window_bounds = array<i64: 8, 64>}, {transform_indices = @transform_1, window_bounds = array<i64: 8, 64>}, {transform_indices = @transform_2, window_bounds = array<i64: 8, 64>}, {transform_indices = @transform_3, window_bounds = array<i64: 1, 8>}, {transform_indices = @transform_4, window_bounds = array<i64: 8, 64>}]} {
    %c0 = arith.constant 0 : index
    %c0_0 = arith.constant 0 : index
    %0 = vector.load %arg1[%c0, %c0_0] : memref<8x64xf32, #tpu.memory_space<vmem>>, vector<8x64xf32>
    %c0_1 = arith.constant 0 : index
    %c0_2 = arith.constant 0 : index
    %1 = vector.load %arg2[%c0_1, %c0_2] : memref<8x64xf32, #tpu.memory_space<vmem>>, vector<8x64xf32>
    %c0_3 = arith.constant 0 : index
    %c0_4 = arith.constant 0 : index
    %2 = vector.load %arg3[%c0_3, %c0_4] : memref<8x64xf32, #tpu.memory_space<vmem>>, vector<8x64xf32>
    %3 = arith.addf %0, %1 : vector<8x64xf32>
    %4 = arith.subf %3, %2 : vector<8x64xf32>
    %5 = math.absf %4 : vector<8x64xf32>
    %cst = arith.constant 1.000000e+00 : f32
    %6 = vector.broadcast %cst : f32 to vector<1x64xf32>
    %7 = arith.truncf %5 : vector<8x64xf32> to vector<8x64xbf16>
    %8 = arith.extf %7 : vector<8x64xbf16> to vector<8x64xf32>
    %9 = arith.subf %5, %8 : vector<8x64xf32>
    %cst_5 = arith.constant dense<0.000000e+00> : vector<1x8xf32>
    %10 = tpu.matmul %6, %8, %cst_5 {dimension_numbers = #tpu.dot_dimension_numbers<[1], [1], [0], [0], [0, 0, 1, 0], [], []>} : vector<1x64xf32>, vector<8x64xf32>, vector<1x8xf32> -> vector<1x8xf32>
    %cst_6 = arith.constant dense<0.000000e+00> : vector<1x8xf32>
    %11 = tpu.matmul %6, %9, %cst_6 {dimension_numbers = #tpu.dot_dimension_numbers<[1], [1], [0], [0], [0, 0, 1, 0], [], []>} : vector<1x64xf32>, vector<8x64xf32>, vector<1x8xf32> -> vector<1x8xf32>
    %12 = arith.addf %10, %11 : vector<1x8xf32>
    %cst_7 = arith.constant 1.200000e+01 : f32
    %13 = vector.broadcast %cst_7 : f32 to vector<1x8xf32>
    %14 = arith.subf %13, %12 : vector<1x8xf32>
    %c0_8 = arith.constant 0 : index
    %c0_9 = arith.constant 0 : index
    %15 = vector.load %arg4[%c0_8, %c0_9] : memref<1x8xf32, #tpu.memory_space<vmem>>, vector<1x8xf32>
    tpu.vector_store %arg4[%c0_8, %c0_9], %14 {strides = array<i32>} : memref<1x8xf32, #tpu.memory_space<vmem>>, vector<1x8xf32>,
    %16 = arith.subf %2, %1 : vector<8x64xf32>
    %c0_10 = arith.constant 0 : index
    %c0_11 = arith.constant 0 : index
    %17 = vector.load %arg5[%c0_10, %c0_11] : memref<8x64xf32, #tpu.memory_space<vmem>>, vector<8x64xf32>
    tpu.vector_store %arg5[%c0_10, %c0_11], %16 {strides = array<i32>} : memref<8x64xf32, #tpu.memory_space<vmem>>, vector<8x64xf32>,
    return
  }
  func.func @transform_0(%arg0: i32) -> (i32, i32) {
    %c0_i32 = arith.constant 0 : i32
    %c0_i32_0 = arith.constant 0 : i32
    return %arg0, %c0_i32 : i32, i32
  }
  func.func @transform_1(%arg0: i32) -> (i32, i32) {
    %c0_i32 = arith.constant 0 : i32
    %c0_i32_0 = arith.constant 0 : i32
    return %arg0, %c0_i32 : i32, i32
  }
  func.func @transform_2(%arg0: i32) -> (i32, i32) {
    %c0_i32 = arith.constant 0 : i32
    %c0_i32_0 = arith.constant 0 : i32
    return %arg0, %c0_i32 : i32, i32
  }
  func.func @transform_3(%arg0: i32) -> (i32, i32) {
    %c0_i32 = arith.constant 0 : i32
    %c0_i32_0 = arith.constant 0 : i32
    return %arg0, %c0_i32 : i32, i32
  }
  func.func @transform_4(%arg0: i32) -> (i32, i32) {
    %c0_i32 = arith.constant 0 : i32
    %c0_i32_0 = arith.constant 0 : i32
    return %arg0, %c0_i32 : i32, i32
  }
}

</mosaic_0001>

<llo_original>
// kernel: tpu_custom_call.1
$region0: #{tpu_custom_call.1}
  #allocation0 [shape = 'u32[]', space=smem, size = 0x4, offset = 0x4, fixed_abs, tag = 'smem constant byte address 0x4 - core index']
  #allocation1 [shape = 'u32[144,128]{1,0:T(1,128)}', space=vmem, size = 0x12000, scoped, tag = 'internal scratch']
  %s0 = inlined_call_operand.hbm [shape: f32[8,64], index: 0, kind: input, shape index: {}]
  %s1 = inlined_call_operand.hbm [shape: f32[8,64], index: 1, kind: input, shape index: {}]
  %s2 = inlined_call_operand.hbm [shape: f32[8,64], index: 2, kind: input, shape index: {}]
  %s3 = inlined_call_operand.hbm [shape: f32[1,8], index: 3, kind: output, shape index: {0}]
  %s4 = inlined_call_operand.hbm [shape: f32[8,64], index: 4, kind: output, shape index: {1}]
  %5 = xla_tuple %s3, %s4
  %s6 = sld [smem:[#allocation0]]
  $region42: #{tpu_custom_call.1} parent=0
    _
  %s8 = ssub.s32 1, %s6
  %s9 = scalar_select 0, %s8, %s6
  $region1: #{tpu_custom_call.1} parent=0
    #allocation2 [shape = 'u8[4096]{0}', space=vmem, size = 0x1000, scoped, tag = 'input window, operand 0, single buffered']
    #allocation3 [shape = 's32[1]{0}', space=sflag, size = 0x4, scoped, tag = 'scoped memory for tpu_custom_call.1']
    #allocation4 [shape = 's32[1]{0}', space=sflag, size = 0x4, scoped, tag = 'scoped memory for tpu_custom_call.1']
    #allocation5 [shape = 'u8[4096]{0}', space=vmem, size = 0x1000, scoped, tag = 'input window, operand 1, single buffered']
    #allocation6 [shape = 's32[1]{0}', space=sflag, size = 0x4, scoped, tag = 'scoped memory for tpu_custom_call.1']
    #allocation7 [shape = 'u8[4096]{0}', space=vmem, size = 0x1000, scoped, tag = 'input window, operand 2, single buffered']
    #allocation8 [shape = 'u8[512]{0}', space=vmem, size = 0x400, scoped, tag = 'output window, operand 0, single buffered']
    #allocation9 [shape = 'u8[4096]{0}', space=vmem, size = 0x1000, scoped, tag = 'output window, operand 1, single buffered']
    #allocation10 [shape = 's32[1]{0}', space=sflag, size = 0x4, scoped, tag = 'scoped memory for tpu_custom_call.1']
    %10 = vsyncpa [#allocation3], 0
    %11 = vsyncpa [#allocation6], 0
    %12 = vsyncpa [#allocation4], 0
    %13 = vsyncpa [#allocation10], 0
    // Predicated region
    $region2: #{tpu_custom_call.1} parent=1 // pred_check
      _
    $region3: #{tpu_custom_call.1} parent=1 // pred_check_branch
      %15 = sbr.rel (0) target = $region5
    $region4: #{tpu_custom_call.1} parent=1 // pred_region
      %s17 = ssub.s32 128, 128
      %18 = vsyncadd [#allocation3], %s17
      %s20 = sshll.u32 [#allocation2], 4
      %s21 = int_to_ptr.vmem [resolvable:$true] %s20
      %23 = dma.hbm_to_vmem [thread:$0]  %s0, 128, %s21, [#allocation3]
    $region5: #{tpu_custom_call.1} parent=1 // pred_fallthru
      _
    // Predicated region
    $region6: #{tpu_custom_call.1} parent=1 // pred_check
      _
    $region7: #{tpu_custom_call.1} parent=1 // pred_check_branch
      %25 = sbr.rel (0) target = $region9
    $region8: #{tpu_custom_call.1} parent=1 // pred_region
      %s27 = ssub.s32 128, 128
      %28 = vsyncadd [#allocation6], %s27
      %s30 = sshll.u32 [#allocation5], 4
      %s31 = int_to_ptr.vmem [resolvable:$true] %s30
      %33 = dma.hbm_to_vmem [thread:$0]  %s1, 128, %s31, [#allocation6]
    $region9: #{tpu_custom_call.1} parent=1 // pred_fallthru
      _
    // Predicated region
    $region10: #{tpu_custom_call.1} parent=1 // pred_check
      _
    $region11: #{tpu_custom_call.1} parent=1 // pred_check_branch
      %35 = sbr.rel (0) target = $region13
    $region12: #{tpu_custom_call.1} parent=1 // pred_region
      %s37 = ssub.s32 128, 128
      %38 = vsyncadd [#allocation6], %s37
      %s40 = sshll.u32 [#allocation7], 4
      %s41 = int_to_ptr.vmem [resolvable:$true] %s40
      %43 = dma.hbm_to_vmem [thread:$0]  %s2, 128, %s41, [#allocation6]
    $region13: #{tpu_custom_call.1} parent=1 // pred_fallthru
      _
    // Predicated region
    $region14: #{tpu_custom_call.1} parent=1 // pred_check
      _
    $region15: #{tpu_custom_call.1} parent=1 // pred_check_branch
      %45 = sbr.rel (0) target = $region17
    $region16: #{tpu_custom_call.1} parent=1 // pred_region
      %46 = dma.done [#allocation3], 128
    $region17: #{tpu_custom_call.1} parent=1 // pred_fallthru
      _
    // Predicated region
    $region18: #{tpu_custom_call.1} parent=1 // pred_check
      _
    $region19: #{tpu_custom_call.1} parent=1 // pred_check_branch
      %48 = sbr.rel (0) target = $region21
    $region20: #{tpu_custom_call.1} parent=1 // pred_region
      %49 = dma.done [#allocation6], 128
    $region21: #{tpu_custom_call.1} parent=1 // pred_fallthru
      _
    // Predicated region
    $region22: #{tpu_custom_call.1} parent=1 // pred_check
      _
    $region23: #{tpu_custom_call.1} parent=1 // pred_check_branch
      %51 = sbr.rel (0) target = $region25
    $region24: #{tpu_custom_call.1} parent=1 // pred_region
      %52 = dma.done [#allocation6], 128
    $region25: #{tpu_custom_call.1} parent=1 // pred_fallthru
      _
    %v53 = vld [vmem:[#allocation2] sm:$0xff]
    %v54 = vld [vmem:[#allocation5] sm:$0xff]
    %v55 = vld [vmem:[#allocation7] sm:$0xff]
    %v56 = vadd.f32 %v53, %v54
    %v57 = vsub.f32 %v56, %v55
    %v58 = vand.u32 2147483647, %v57
    %v59 = vpack.c.bf16 %v58, %v58
    %v60 = vunpack.c.l.bf16 %v59
    %v61 = vsub.f32 %v58, %v60
    %vm62 = vcmask 523264
    %v64 = vsel %vm62, 1.0, 0
    %v67 = vsel %vm62, %v61, 0
    %69 = vmatprep.subr.mxu0 0.0
    %70 = vmatpush1.xpose.msra.mxu0 0.0
    %71 = vmatprep.subr.mxu0 0.0
    %72 = vmatpush1.xpose.msra.mxu0 0.0
    %73 = vmatprep.subr.mxu0 0.0
    %74 = vmatpush1.xpose.msra.mxu0 0.0
    %75 = vmatprep.subr.mxu0 0.0
    %76 = vmatpush1.xpose.msra.mxu0 0.0
    %77 = vmatprep.subr.mxu0 0.0
    %78 = vmatpush1.xpose.msra.mxu0 0.0
    %79 = vmatprep.subr.mxu0 0.0
    %80 = vmatpush1.xpose.msra.mxu0 0.0
    %81 = vmatprep.subr.mxu0 0.0
    %82 = vmatpush1.xpose.msra.mxu0 0.0
    %83 = vmatprep.subr.mxu0 0.0
    %84 = vmatpush1.xpose.msra.mxu0 0.0
    %85 = vmatprep.subr.mxu0 0.0
    %86 = vmatpush1.xpose.msra.mxu0 0.0
    %87 = vmatprep.subr.mxu0 0.0
    %88 = vmatpush1.xpose.msra.mxu0 0.0
    %89 = vmatprep.subr.mxu0 0.0
    %90 = vmatpush1.xpose.msra.mxu0 0.0
    %91 = vmatprep.subr.mxu0 0.0
    %92 = vmatpush1.xpose.msra.mxu0 0.0
    %93 = vmatprep.subr.mxu0 0.0
    %94 = vmatpush1.xpose.msra.mxu0 0.0
    %95 = vmatprep.subr.mxu0 0.0
    %96 = vmatpush1.xpose.msra.mxu0 0.0
    %97 = vmatprep.subr.mxu0 0.0
    %98 = vmatpush1.xpose.msra.mxu0 0.0
    %99 = vmatprep.subr.mxu0 0.0
    %100 = vmatpush1.xpose.msra.mxu0 %v67
    %101 = vmatprep.subr.mxu0 0.0
    %102 = vmatpush2.xpose.msra.mxu0 0.0
    %103 = vmatprep.subr.mxu0 0.0
    %104 = vmatpush2.xpose.msra.mxu0 0.0
    %105 = vmatprep.subr.mxu0 0.0
    %106 = vmatpush2.xpose.msra.mxu0 0.0
    %107 = vmatprep.subr.mxu0 0.0
    %108 = vmatpush2.xpose.msra.mxu0 0.0
    %109 = vmatprep.subr.mxu0 0.0
    %110 = vmatpush2.xpose.msra.mxu0 0.0
    %111 = vmatprep.subr.mxu0 0.0
    %112 = vmatpush2.xpose.msra.mxu0 0.0
    %113 = vmatprep.subr.mxu0 0.0
    %114 = vmatpush2.xpose.msra.mxu0 0.0
    %115 = vmatprep.subr.mxu0 0.0
    %116 = vmatpush2.xpose.msra.mxu0 0.0
    %117 = vmatprep.subr.mxu0 0.0
    %118 = vmatpush2.xpose.msra.mxu0 0.0
    %119 = vmatprep.subr.mxu0 0.0
    %120 = vmatpush2.xpose.msra.mxu0 0.0
    %121 = vmatprep.subr.mxu0 0.0
    %122 = vmatpush2.xpose.msra.mxu0 0.0
    %123 = vmatprep.subr.mxu0 0.0
    %124 = vmatpush2.xpose.msra.mxu0 0.0
    %125 = vmatprep.subr.mxu0 0.0
    %126 = vmatpush2.xpose.msra.mxu0 0.0
    %127 = vmatprep.subr.mxu0 0.0
    %128 = vmatpush2.xpose.msra.mxu0 0.0
    %129 = vmatprep.subr.mxu0 0.0
    %130 = vmatpush2.xpose.msra.mxu0 0.0
    %131 = vmatprep.subr.mxu0 0.0
    %132 = vmatpush2.xpose.msra.mxu0 0.0
    %133 = vmatprep.mubr.f32.mxu0 0.0
    %134 = vmatmul.mubr.f32.gmra.mxu0 %v64
    %v135 = vpop.f32.mrf.mxu0
    %v136 = vadd.f32 0.0, %v135
    %v137 = vpop.f32.mrf.mxu0
    %138 = vdwg.mxu0
    %v140 = vsel %vm62, %v60, 0
    %142 = vmatprep.subr.mxu0 0.0
    %143 = vmatpush1.xpose.msra.mxu0 0.0
    %144 = vmatprep.subr.mxu0 0.0
    %145 = vmatpush1.xpose.msra.mxu0 0.0
    %146 = vmatprep.subr.mxu0 0.0
    %147 = vmatpush1.xpose.msra.mxu0 0.0
    %148 = vmatprep.subr.mxu0 0.0
    %149 = vmatpush1.xpose.msra.mxu0 0.0
    %150 = vmatprep.subr.mxu0 0.0
    %151 = vmatpush1.xpose.msra.mxu0 0.0
    %152 = vmatprep.subr.mxu0 0.0
    %153 = vmatpush1.xpose.msra.mxu0 0.0
    %154 = vmatprep.subr.mxu0 0.0
    %155 = vmatpush1.xpose.msra.mxu0 0.0
    %156 = vmatprep.subr.mxu0 0.0
    %157 = vmatpush1.xpose.msra.mxu0 0.0
    %158 = vmatprep.subr.mxu0 0.0
    %159 = vmatpush1.xpose.msra.mxu0 0.0
    %160 = vmatprep.subr.mxu0 0.0
    %161 = vmatpush1.xpose.msra.mxu0 0.0
    %162 = vmatprep.subr.mxu0 0.0
    %163 = vmatpush1.xpose.msra.mxu0 0.0
    %164 = vmatprep.subr.mxu0 0.0
    %165 = vmatpush1.xpose.msra.mxu0 0.0
    %166 = vmatprep.subr.mxu0 0.0
    %167 = vmatpush1.xpose.msra.mxu0 0.0
    %168 = vmatprep.subr.mxu0 0.0
    %169 = vmatpush1.xpose.msra.mxu0 0.0
    %170 = vmatprep.subr.mxu0 0.0
    %171 = vmatpush1.xpose.msra.mxu0 0.0
    %172 = vmatprep.subr.mxu0 0.0
    %173 = vmatpush1.xpose.msra.mxu0 %v140
    %174 = vmatprep.subr.mxu0 0.0
    %175 = vmatpush2.xpose.msra.mxu0 0.0
    %176 = vmatprep.subr.mxu0 0.0
    %177 = vmatpush2.xpose.msra.mxu0 0.0
    %178 = vmatprep.subr.mxu0 0.0
    %179 = vmatpush2.xpose.msra.mxu0 0.0
    %180 = vmatprep.subr.mxu0 0.0
    %181 = vmatpush2.xpose.msra.mxu0 0.0
    %182 = vmatprep.subr.mxu0 0.0
    %183 = vmatpush2.xpose.msra.mxu0 0.0
    %184 = vmatprep.subr.mxu0 0.0
    %185 = vmatpush2.xpose.msra.mxu0 0.0
    %186 = vmatprep.subr.mxu0 0.0
    %187 = vmatpush2.xpose.msra.mxu0 0.0
    %188 = vmatprep.subr.mxu0 0.0
    %189 = vmatpush2.xpose.msra.mxu0 0.0
    %190 = vmatprep.subr.mxu0 0.0
    %191 = vmatpush2.xpose.msra.mxu0 0.0
    %192 = vmatprep.subr.mxu0 0.0
    %193 = vmatpush2.xpose.msra.mxu0 0.0
    %194 = vmatprep.subr.mxu0 0.0
    %195 = vmatpush2.xpose.msra.mxu0 0.0
    %196 = vmatprep.subr.mxu0 0.0
    %197 = vmatpush2.xpose.msra.mxu0 0.0
    %198 = vmatprep.subr.mxu0 0.0
    %199 = vmatpush2.xpose.msra.mxu0 0.0
    %200 = vmatprep.subr.mxu0 0.0
    %201 = vmatpush2.xpose.msra.mxu0 0.0
    %202 = vmatprep.subr.mxu0 0.0
    %203 = vmatpush2.xpose.msra.mxu0 0.0
    %204 = vmatprep.subr.mxu0 0.0
    %205 = vmatpush2.xpose.msra.mxu0 0.0
    %206 = vmatprep.mubr.f32.mxu0 0.0
    %207 = vmatmul.mubr.f32.gmra.mxu0 %v64
    %v208 = vpop.f32.mrf.mxu0
    %v209 = vadd.f32 %v136, %v208
    %v210 = vpop.f32.mrf.mxu0
    %211 = vdwg.mxu0
    %v212 = vsub.f32 12.0, %v209
    %vm213 = vcmask 57344
    %214 = vst.msk [vmem:[#allocation8] sm:$0x1] %vm213, %v212
    %v215 = vsub.f32 %v55, %v54
    %216 = vst.msk [vmem:[#allocation9] sm:$0xff] %vm62, %v215
    // Predicated region
    $region26: #{tpu_custom_call.1} parent=1 // pred_check
      _
    $region27: #{tpu_custom_call.1} parent=1 // pred_check_branch
      %218 = sbr.rel (0) target = $region29
    $region28: #{tpu_custom_call.1} parent=1 // pred_region
      %s220 = ssub.s32 16, 16
      %221 = vsyncadd [#allocation4], %s220
      %s223 = sshll.u32 [#allocation8], 4
      %s224 = int_to_ptr.vmem [resolvable:$true] %s223
      %226 = dma.vmem_to_hbm [thread:$0]  %s224, 16, %s3, [#allocation4]
    $region29: #{tpu_custom_call.1} parent=1 // pred_fallthru
      _
    // Predicated region
    $region30: #{tpu_custom_call.1} parent=1 // pred_check
      _
    $region31: #{tpu_custom_call.1} parent=1 // pred_check_branch
      %228 = sbr.rel (0) target = $region33
    $region32: #{tpu_custom_call.1} parent=1 // pred_region
      %s230 = ssub.s32 128, 128
      %231 = vsyncadd [#allocation10], %s230
      %s233 = sshll.u32 [#allocation9], 4
      %s234 = int_to_ptr.vmem [resolvable:$true] %s233
      %236 = dma.vmem_to_hbm [thread:$0]  %s234, 128, %s4, [#allocation10]
    $region33: #{tpu_custom_call.1} parent=1 // pred_fallthru
      _
    // Predicated region
    $region34: #{tpu_custom_call.1} parent=1 // pred_check
      _
    $region35: #{tpu_custom_call.1} parent=1 // pred_check_branch
      %238 = sbr.rel (0) target = $region37
    $region36: #{tpu_custom_call.1} parent=1 // pred_region
      %239 = dma.done [#allocation4], 16
    $region37: #{tpu_custom_call.1} parent=1 // pred_fallthru
      _
    // Predicated region
    $region38: #{tpu_custom_call.1} parent=1 // pred_check
      _
    $region39: #{tpu_custom_call.1} parent=1 // pred_check_branch
      %241 = sbr.rel (0) target = $region41
    $region40: #{tpu_custom_call.1} parent=1 // pred_region
      %242 = dma.done [#allocation10], 128
    $region41: #{tpu_custom_call.1} parent=1 // pred_fallthru
      _
    %243 = vsyncpa [#allocation3], 1
    %244 = vsyncpa [#allocation6], 1
    %245 = vsyncpa [#allocation4], 1
    %246 = vsyncpa [#allocation10], 1

</llo_original>
